<compile_context>
chip_gen: v7x
topology: tpu7x:2x2x1
jax: 0.10.0
libtpu: 0.0.40
codegen_flags: <defaults>
</compile_context>

<pallas_src>
import functools
import math

import jax
import jax.numpy as jnp
from jax.experimental import pallas as pl
from jax.experimental.pallas import tpu as pltpu


# ----------------------------------------------------------------------------
# Pallas kernels
# ----------------------------------------------------------------------------
def _matmul_bias_act_kernel(apply_relu, x_ref, w_ref, b_ref, o_ref):
    """One fused MXU tile: o = [relu](x @ w + b).

    x_ref: (TM, K); w_ref: (K, Cout); b_ref: (1, Cout); o_ref: (TM, Cout).
    """
    y = jnp.dot(x_ref[...], w_ref[...], preferred_element_type=jnp.float32)
    y = y + b_ref[...]
    if apply_relu:
        y = jnp.maximum(y, 0.0)
    o_ref[...] = y


def _add_gn_relu_kernel(eps, x1_ref, x2_ref, g_ref, b_ref, o_ref):
    """Fused (x1 + x2) -> GroupNorm -> ReLU.

    x1_ref/x2_ref: (1, G, Cg, L); g_ref/b_ref: (G, Cg, 1); o_ref: (1, G, Cg, L)
    """
    x = x1_ref[0] + x2_ref[0]                       # (G, Cg, L)
    _, Cg, L = x.shape
    n = float(Cg * L)
    s1 = jnp.sum(x, axis=2, keepdims=True)          # (G, Cg, 1)
    mean = jnp.sum(s1, axis=1, keepdims=True) / n   # (G, 1, 1)
    d = x - mean
    v1 = jnp.sum(d * d, axis=2, keepdims=True)      # (G, Cg, 1)
    var = jnp.sum(v1, axis=1, keepdims=True) / n    # (G, 1, 1)
    xn = d * jax.lax.rsqrt(var + eps)
    y = xn * g_ref[...] + b_ref[...]
    o_ref[0] = jnp.maximum(y, 0.0)


# ----------------------------------------------------------------------------
# Pallas wrappers
# ----------------------------------------------------------------------------
def matmul_bias_act(lhs, rhs, bias, relu=False, tile_m=1024):
    """out = [relu](lhs @ rhs + bias); lhs (M, K), rhs (K, N), bias (1, N)."""
    M, K = lhs.shape
    K2, N = rhs.shape
    assert K == K2
    M8 = max(8, ((M + 7) // 8) * 8)
    tm = M8 if M8 <= tile_m else tile_m
    Mp = ((M + tm - 1) // tm) * tm
    if Mp != M:
        lhs = jnp.pad(lhs, ((0, Mp - M), (0, 0)))
    kernel = functools.partial(_matmul_bias_act_kernel, relu)
    out = pl.pallas_call(
        kernel,
        out_shape=jax.ShapeDtypeStruct((Mp, N), jnp.float32),
        grid=(Mp // tm,),
        in_specs=[
            pl.BlockSpec((tm, K), lambda i: (i, 0)),
            pl.BlockSpec((K, N), lambda i: (0, 0)),   # weights stay VMEM-resident
            pl.BlockSpec((1, N), lambda i: (0, 0)),   # bias stays VMEM-resident
        ],
        out_specs=pl.BlockSpec((tm, N), lambda i: (i, 0)),
        compiler_params=pltpu.CompilerParams(dimension_semantics=("parallel",)),
    )(lhs, rhs, bias)
    return out if Mp == M else out[:M]


def conv2d(x, w, b, stride=(1, 1), padding=(0, 0), relu=False):
    """NCHW conv2d matching torch.nn.Conv2d (cross-correlation) as im2col+matmul."""
    N, Cin, H, W = x.shape
    Cout, _, KH, KW = w.shape
    ph, pw = padding
    sh, sw = stride
    Ho = (H + 2 * ph - KH) // sh + 1
    Wo = (W + 2 * pw - KW) // sw + 1
    xh = jnp.transpose(x, (0, 2, 3, 1))                              # NHWC
    xp = jnp.pad(xh, ((0, 0), (ph, ph), (pw, pw), (0, 0)))
    # im2col via static strided slices (XLA); stride applied here so only the
    # kept output positions are ever computed by the MXU.
    cols = []
    for kh in range(KH):
        for kw in range(KW):
            cols.append(xp[:, kh:kh + sh * (Ho - 1) + 1:sh,
                           kw:kw + sw * (Wo - 1) + 1:sw, :])          # (N,Ho,Wo,Cin)
    col = jnp.concatenate(cols, axis=-1)                              # (N,Ho,Wo,K)
    K = KH * KW * Cin
    lhs = col.reshape(N * Ho * Wo, K)
    wk = jnp.transpose(w, (2, 3, 1, 0)).reshape(K, Cout)              # (kh,kw,cin)->K
    out = matmul_bias_act(lhs, wk, b.reshape(1, Cout), relu=relu)
    out = out.reshape(N, Ho, Wo, Cout)
    return jnp.transpose(out, (0, 3, 1, 2))                           # NCHW


def add_group_norm_relu(x1, x2, gamma, beta, groups=4, eps=1e-5):
    """GroupNorm(groups)(x1 + x2) + ReLU over (B, C, *spatial) tensors (fused)."""
    shape = x1.shape
    B, C = shape[0], shape[1]
    L = int(math.prod(shape[2:]))
    Cg = C // groups
    a = x1.reshape(B, groups, Cg, L)
    c = x2.reshape(B, groups, Cg, L)
    g = gamma.reshape(groups, Cg, 1)
    bt = beta.reshape(groups, Cg, 1)
    kernel = functools.partial(_add_gn_relu_kernel, eps)
    out = pl.pallas_call(
        kernel,
        out_shape=jax.ShapeDtypeStruct((B, groups, Cg, L), jnp.float32),
        grid=(B,),
        in_specs=[
            pl.BlockSpec((1, groups, Cg, L), lambda i: (i, 0, 0, 0)),
            pl.BlockSpec((1, groups, Cg, L), lambda i: (i, 0, 0, 0)),
            pl.BlockSpec((groups, Cg, 1), lambda i: (0, 0, 0)),
            pl.BlockSpec((groups, Cg, 1), lambda i: (0, 0, 0)),
        ],
        out_specs=pl.BlockSpec((1, groups, Cg, L), lambda i: (i, 0, 0, 0)),
        compiler_params=pltpu.CompilerParams(dimension_semantics=("parallel",)),
    )(a, c, g, bt)
    return out.reshape(shape)


def _interp_matrix(out_size, in_size):
    """Row-interpolation matrix for bilinear align_corners=True."""
    if out_size == 1 or in_size == 1:
        src = jnp.zeros((out_size,), jnp.float32)
    else:
        src = jnp.arange(out_size, dtype=jnp.float32) * (in_size - 1) / (out_size - 1)
    i0 = jnp.clip(jnp.floor(src).astype(jnp.int32), 0, in_size - 1)
    i1 = jnp.clip(i0 + 1, 0, in_size - 1)
    f = src - i0.astype(jnp.float32)
    m = (jax.nn.one_hot(i0, in_size, dtype=jnp.float32) * (1.0 - f)[:, None]
         + jax.nn.one_hot(i1, in_size, dtype=jnp.float32) * f[:, None])
    return m


def bilinear_resize(x, size):
    """F.interpolate(x, size, mode='bilinear', align_corners=True), NCHW.

    Implemented as two fat-M Pallas matmuls (W-interp then H-interp)."""
    N, C, H, W = x.shape
    Ho, Wo = int(size[0]), int(size[1])
    MwT = _interp_matrix(Wo, W).T        # (W, Wo)
    MhT = _interp_matrix(Ho, H).T        # (H, Ho)
    zb_w = jnp.zeros((1, Wo), jnp.float32)
    zb_h = jnp.zeros((1, Ho), jnp.float32)
    t = matmul_bias_act(x.reshape(N * C * H, W), MwT, zb_w)           # (N*C*H, Wo)
    t = t.reshape(N, C, H, Wo)
    t = jnp.transpose(t, (0, 1, 3, 2)).reshape(N * C * Wo, H)
    o = matmul_bias_act(t, MhT, zb_h)                                  # (N*C*Wo, Ho)
    o = o.reshape(N, C, Wo, Ho)
    return jnp.transpose(o, (0, 1, 3, 2))                              # (N, C, Ho, Wo)


# ----------------------------------------------------------------------------
# Module glue (mirrors the PyTorch forward pass)
# ----------------------------------------------------------------------------
def center_pivot_conv4d_branches(x, p, stride4d, pad4d):
    """CenterPivotConv4d.forward on (bsz, inch, ha, wa, hb, wb) -> (out1, out2)."""
    s34 = stride4d[2:]
    assert s34[0] == s34[1], "asymmetric 4D strides not supported (matches MGCD use)"
    out1_in = x[:, :, :, :, ::s34[0], ::s34[1]] if s34[-1] > 1 else x

    bsz, inch, ha, wa, hb2, wb2 = out1_in.shape
    o1 = jnp.transpose(out1_in, (0, 4, 5, 1, 2, 3)).reshape(bsz * hb2 * wb2, inch, ha, wa)
    o1 = conv2d(o1, p['w1'], p['b1'], stride=stride4d[:2], padding=pad4d[:2])
    outch, oha, owa = o1.shape[1], o1.shape[2], o1.shape[3]
    o1 = jnp.transpose(o1.reshape(bsz, hb2, wb2, outch, oha, owa), (0, 3, 4, 5, 1, 2))

    bsz, inch, ha, wa, hb, wb = x.shape
    o2 = jnp.transpose(x, (0, 2, 3, 1, 4, 5)).reshape(bsz * ha * wa, inch, hb, wb)
    o2 = conv2d(o2, p['w2'], p['b2'], stride=s34, padding=pad4d[2:])
    outch, ohb, owb = o2.shape[1], o2.shape[2], o2.shape[3]
    o2 = jnp.transpose(o2.reshape(bsz, ha, wa, outch, ohb, owb), (0, 3, 1, 2, 4, 5))

    # padding is always (k//2, k//2) >= 1 in MGCDModule, so shapes always match;
    # the o1 + o2 add is fused into the GroupNorm+ReLU kernel by the caller.
    return o1, o2


def apply_building_block(x, block_params, kernel_sizes, strides, group=4):
    for p, ksz, st in zip(block_params, kernel_sizes, strides):
        str4d = (1, 1, st, st)
        pad4d = (ksz // 2,) * 4
        o1, o2 = center_pivot_conv4d_branches(x, p, str4d, pad4d)
        x = add_group_norm_relu(o1, o2, p['gn_g'], p['gn_b'], groups=group)
    return x


def interpolate_support_dims(hc, spatial_size):
    bsz, ch, ha, wa, hb, wb = hc.shape
    x = jnp.transpose(hc, (0, 4, 5, 1, 2, 3)).reshape(bsz * hb * wb, ch, ha, wa)
    x = bilinear_resize(x, spatial_size)
    oha, owa = int(spatial_size[0]), int(spatial_size[1])
    x = jnp.transpose(x.reshape(bsz, hb, wb, ch, oha, owa), (0, 3, 4, 5, 1, 2))
    return x


def mgcd_forward(params, hypercorr_pyramid, query_mask=None):
    sqz4 = apply_building_block(hypercorr_pyramid[0], params['enc4'], [3, 3, 3], [2, 2, 2])
    sqz3 = apply_building_block(hypercorr_pyramid[1], params['enc3'], [5, 3, 3], [4, 2, 2])
    sqz2 = apply_building_block(hypercorr_pyramid[2], params['enc2'], [5, 5, 3], [4, 4, 2])

    sqz4 = interpolate_support_dims(sqz4, sqz3.shape[2:4])
    mix43 = sqz4 + sqz3
    mix43 = apply_building_block(mix43, params['enc43'], [3, 3, 3], [1, 1, 1])

    mix43 = interpolate_support_dims(mix43, sqz2.shape[2:4])
    mix432 = mix43 + sqz2
    mix432 = apply_building_block(mix432, params['enc32'], [3, 3, 3], [1, 1, 1])

    bsz, ch, ha, wa, hb, wb = mix432.shape
    enc = mix432.reshape(bsz, ch, ha, wa, hb * wb).mean(axis=-1)

    # query_mask=None branch of MGCDModule.forward (concat with itself).
    # TODO(synk): MGFE masked-average-pooling branch (query_mask is not None) not implemented.
    enc = jnp.concatenate([enc, enc], axis=1)

    d = conv2d(enc, params['dec1_w1'], params['dec1_b1'], padding=(1, 1), relu=True)
    d = conv2d(d, params['dec1_w2'], params['dec1_b2'], padding=(1, 1), relu=True)
    up = (d.shape[-1] * 2, d.shape[-1] * 2)
    d = bilinear_resize(d, up)
    d = conv2d(d, params['dec2_w1'], params['dec2_b1'], padding=(1, 1), relu=True)
    logit = conv2d(d, params['dec2_w2'], params['dec2_b2'], padding=(1, 1), relu=False)
    return logit


# ----------------------------------------------------------------------------
# Deterministic parameter init (shapes per MGCDModule.__init__)
# ----------------------------------------------------------------------------
def _init_cpconv(key, in_ch, out_ch, k):
    k1, k2, k3, k4 = jax.random.split(key, 4)
    s = 1.0 / math.sqrt(in_ch * k * k)
    return dict(
        w1=jax.random.uniform(k1, (out_ch, in_ch, k, k), jnp.float32, -s, s),
        b1=jax.random.uniform(k2, (out_ch,), jnp.float32, -s, s),
        w2=jax.random.uniform(k3, (out_ch, in_ch, k, k), jnp.float32, -s, s),
        b2=jax.random.uniform(k4, (out_ch,), jnp.float32, -s, s),
        gn_g=jnp.ones((out_ch,), jnp.float32),
        gn_b=jnp.zeros((out_ch,), jnp.float32),
    )


def init_params(key, inch):
    keys = list(jax.random.split(key, 32))
    it = iter(keys)

    def block_params(in_ch, outs, ks):
        ps, c = [], in_ch
        for o, k in zip(outs, ks):
            ps.append(_init_cpconv(next(it), c, o, k))
            c = o
        return ps

    def conv_p(cout, cin, k=3):
        k1, k2 = jax.random.split(next(it))
        s = 1.0 / math.sqrt(cin * k * k)
        return (jax.random.uniform(k1, (cout, cin, k, k), jnp.float32, -s, s),
                jax.random.uniform(k2, (cout,), jnp.float32, -s, s))

    outch1, outch2, outch3, outch4 = 16, 32, 64, 128
    p = {}
    p['enc4'] = block_params(inch[0], [outch1, outch2, outch3], [3, 3, 3])
    p['enc3'] = block_params(inch[1], [outch1, outch2, outch3], [5, 3, 3])
    p['enc2'] = block_params(inch[2], [outch1, outch2, outch3], [5, 5, 3])
    p['enc43'] = block_params(outch3, [outch3, outch3, outch3], [3, 3, 3])
    p['enc32'] = block_params(outch3, [outch3, outch3, outch3], [3, 3, 3])
    p['dec1_w1'], p['dec1_b1'] = conv_p(outch3, outch4)
    p['dec1_w2'], p['dec1_b2'] = conv_p(outch2, outch3)
    p['dec2_w1'], p['dec2_b1'] = conv_p(outch1, outch2)
    p['dec2_w2'], p['dec2_b2'] = conv_p(2, outch1)
    return p


# ----------------------------------------------------------------------------
if __name__ == "__main__":
    inch = (2, 2, 2)
    params = init_params(jax.random.PRNGKey(0), inch)

    kp = jax.random.split(jax.random.PRNGKey(0), 3)
    hypercorr_pyramid = [
        jax.random.normal(kp[0], (1, inch[0], 4, 4, 4, 4), jnp.float32),
        jax.random.normal(kp[1], (1, inch[1], 8, 8, 8, 8), jnp.float32),
        jax.random.normal(kp[2], (1, inch[2], 16, 16, 16, 16), jnp.float32),
    ]

    logit = mgcd_forward(params, hypercorr_pyramid, query_mask=None)
    logit = jax.block_until_ready(logit)
    assert logit.shape == (1, 2, 32, 32), logit.shape
    assert bool(jnp.all(jnp.isfinite(logit)))
    print("KERNEL_OK")
</pallas_src>

<mosaic_0001>
module attributes {stable_mosaic.version = 11 : i64} {
  func.func @_matmul_bias_act_kernel(%arg0: i32, %arg1: memref<64x18xf32, #tpu.memory_space<vmem>>, %arg2: memref<18x16xf32, #tpu.memory_space<vmem>>, %arg3: memref<1x16xf32, #tpu.memory_space<vmem>>, %arg4: memref<64x16xf32, #tpu.memory_space<vmem>>) attributes {dimension_semantics = [#tpu.dimension_semantics<parallel>], iteration_bounds = array<i64: 1>, scalar_prefetch = 0 : i64, scratch_operands = 0 : i64, tpu.core_type = #tpu.core_type<tc>, window_params = [{transform_indices = @transform_0, window_bounds = array<i64: 64, 18>}, {pipeline_mode = #tpu.pipeline_mode<synchronous>, transform_indices = @transform_1, window_bounds = array<i64: 18, 16>}, {pipeline_mode = #tpu.pipeline_mode<synchronous>, transform_indices = @transform_2, window_bounds = array<i64: 1, 16>}, {transform_indices = @transform_3, window_bounds = array<i64: 64, 16>}]} {
    %c0 = arith.constant 0 : index
    %c0_0 = arith.constant 0 : index
    %0 = vector.load %arg1[%c0, %c0_0] : memref<64x18xf32, #tpu.memory_space<vmem>>, vector<64x18xf32>
    %c0_1 = arith.constant 0 : index
    %c0_2 = arith.constant 0 : index
    %1 = vector.load %arg2[%c0_1, %c0_2] : memref<18x16xf32, #tpu.memory_space<vmem>>, vector<18x16xf32>
    %cst = arith.constant dense<0.000000e+00> : vector<64x16xf32>
    %2 = tpu.matmul %0, %1, %cst {dimension_numbers = #tpu.dot_dimension_numbers<[1], [0], [0], [1], [0, 0, 1, 1], [], []>} : vector<64x18xf32>, vector<18x16xf32>, vector<64x16xf32> -> vector<64x16xf32>
    %c0_3 = arith.constant 0 : index
    %c0_4 = arith.constant 0 : index
    %3 = vector.load %arg3[%c0_3, %c0_4] : memref<1x16xf32, #tpu.memory_space<vmem>>, vector<1x16xf32>
    %4 = vector.broadcast %3 : vector<1x16xf32> to vector<64x16xf32>
    %5 = arith.addf %2, %4 : vector<64x16xf32>
    %c0_5 = arith.constant 0 : index
    %c0_6 = arith.constant 0 : index
    %6 = vector.load %arg4[%c0_5, %c0_6] : memref<64x16xf32, #tpu.memory_space<vmem>>, vector<64x16xf32>
    tpu.vector_store %arg4[%c0_5, %c0_6], %5 {strides = array<i32>} : memref<64x16xf32, #tpu.memory_space<vmem>>, vector<64x16xf32>,
    return
  }
  func.func @transform_0(%arg0: i32) -> (i32, i32) {
    %c0_i32 = arith.constant 0 : i32
    %c0_i32_0 = arith.constant 0 : i32
    return %arg0, %c0_i32 : i32, i32
  }
  func.func @transform_1(%arg0: i32) -> (i32, i32) {
    %c0_i32 = arith.constant 0 : i32
    %c0_i32_0 = arith.constant 0 : i32
    %c0_i32_1 = arith.constant 0 : i32
    return %c0_i32, %c0_i32_0 : i32, i32
  }
  func.func @transform_2(%arg0: i32) -> (i32, i32) {
    %c0_i32 = arith.constant 0 : i32
    %c0_i32_0 = arith.constant 0 : i32
    %c0_i32_1 = arith.constant 0 : i32
    return %c0_i32, %c0_i32_0 : i32, i32
  }
  func.func @transform_3(%arg0: i32) -> (i32, i32) {
    %c0_i32 = arith.constant 0 : i32
    %c0_i32_0 = arith.constant 0 : i32
    return %arg0, %c0_i32 : i32, i32
  }
}

</mosaic_0001>

<llo_original>
// kernel: tpu_custom_call.1
$region0: #{tpu_custom_call.1}
  #allocation0 [shape = 'u32[]', space=smem, size = 0x4, offset = 0x4, fixed_abs, tag = 'smem constant byte address 0x4 - core index']
  #allocation1 [shape = 'u32[144,128]{1,0:T(1,128)}', space=vmem, size = 0x12000, scoped, tag = 'internal scratch']
  %s0 = inlined_call_operand.vmem [shape: f32[64,18], index: 0, kind: input, shape index: {}]
  %s1 = inlined_call_operand.vmem [shape: f32[18,16], index: 1, kind: input, shape index: {}]
  %s2 = inlined_call_operand.vmem [shape: f32[1,16], index: 2, kind: input, shape index: {}]
  %s3 = inlined_call_operand.vmem [shape: f32[64,16], index: 3, kind: output, shape index: {}]
  %s4 = sld [smem:[#allocation0]]
  $region22: #{tpu_custom_call.1} parent=0
    _
  %s6 = ssub.s32 1, %s4
  %s7 = scalar_select 0, %s6, %s4
  // Predicated region
  $region2: #{tpu_custom_call.1} parent=0 // pred_check
    _
  $region3: #{tpu_custom_call.1} parent=0 // pred_check_branch
    %9 = sbr.rel (0) target = $region5
  $region4: #{tpu_custom_call.1} parent=0 // pred_region
    _
  $region5: #{tpu_custom_call.1} parent=0 // pred_fallthru
    _
  // Predicated region
  $region6: #{tpu_custom_call.1} parent=0 // pred_check
    _
  $region7: #{tpu_custom_call.1} parent=0 // pred_check_branch
    %11 = sbr.rel (0) target = $region9
  $region8: #{tpu_custom_call.1} parent=0 // pred_region
    _
  $region9: #{tpu_custom_call.1} parent=0 // pred_fallthru
    _
  // Predicated region
  $region10: #{tpu_custom_call.1} parent=0 // pred_check
    _
  $region11: #{tpu_custom_call.1} parent=0 // pred_check_branch
    %13 = sbr.rel (0) target = $region13
  $region12: #{tpu_custom_call.1} parent=0 // pred_region
    _
  $region13: #{tpu_custom_call.1} parent=0 // pred_fallthru
    _
  %v14 = vld [vmem:[%s0] sm:$0xff]
  %v15 = vld [vmem:[%s0 + $0x8] sm:$0xff]
  %v16 = vld [vmem:[%s0 + $0x10] sm:$0xff]
  %v17 = vld [vmem:[%s0 + $0x18] sm:$0xff]
  %v18 = vld [vmem:[%s0 + $0x20] sm:$0xff]
  %v19 = vld [vmem:[%s0 + $0x28] sm:$0xff]
  %v20 = vld [vmem:[%s0 + $0x30] sm:$0xff]
  %v21 = vld [vmem:[%s0 + $0x38] sm:$0xff]
  %v22 = vld [vmem:[%s1] sm:$0xff]
  %v23 = vld [vmem:[%s1 + $0x8] sm:$0xff]
  %v24 = vld [vmem:[%s1 + $0x10] sm:$0x3]
  %v25 = vld [vmem:[%s2] sm:$0x1]
  %v27 = vlaneseq
  %v28 = vshrl.u32 %v27, 7
  %v29 = vsub.s32 0, %v28
  %v30 = vrot.slane %v25, %v29
  %vm32 = vcmask 146432
  %v34 = vsel %vm32, %v14, 0
  %v37 = vsel %vm32, %v15, 0
  %v40 = vsel %vm32, %v16, 0
  %v43 = vsel %vm32, %v17, 0
  %v46 = vsel %vm32, %v18, 0
  %v49 = vsel %vm32, %v19, 0
  %v52 = vsel %vm32, %v20, 0
  %v55 = vsel %vm32, %v21, 0
  %vm57 = vcmask 1041408
  %v59 = vsel %vm57, %v24, 0
  %61 = vmatprep.subr.mxu0 0.0
  %62 = vmatpush1.msra.mxu0 %v22
  %63 = vmatprep.subr.mxu0 0.0
  %64 = vmatpush1.msra.mxu0 %v23
  %65 = vmatprep.subr.mxu0 0.0
  %66 = vmatpush1.msra.mxu0 %v59
  %67 = vmatprep.subr.mxu0 0.0
  %68 = vmatpush1.msra.mxu0 0.0
  %69 = vmatprep.subr.mxu0 0.0
  %70 = vmatpush1.msra.mxu0 0.0
  %71 = vmatprep.subr.mxu0 0.0
  %72 = vmatpush1.msra.mxu0 0.0
  %73 = vmatprep.subr.mxu0 0.0
  %74 = vmatpush1.msra.mxu0 0.0
  %75 = vmatprep.subr.mxu0 0.0
  %76 = vmatpush1.msra.mxu0 0.0
  %77 = vmatprep.subr.mxu0 0.0
  %78 = vmatpush1.msra.mxu0 0.0
  %79 = vmatprep.subr.mxu0 0.0
  %80 = vmatpush1.msra.mxu0 0.0
  %81 = vmatprep.subr.mxu0 0.0
  %82 = vmatpush1.msra.mxu0 0.0
  %83 = vmatprep.subr.mxu0 0.0
  %84 = vmatpush1.msra.mxu0 0.0
  %85 = vmatprep.subr.mxu0 0.0
  %86 = vmatpush1.msra.mxu0 0.0
  %87 = vmatprep.subr.mxu0 0.0
  %88 = vmatpush1.msra.mxu0 0.0
  %89 = vmatprep.subr.mxu0 0.0
  %90 = vmatpush1.msra.mxu0 0.0
  %91 = vmatprep.subr.mxu0 0.0
  %92 = vmatpush1.msra.mxu0 0.0
  %93 = vmatprep.subr.mxu0 0.0
  %94 = vmatpush1.msra.mxu0 0.0
  %95 = vmatprep.subr.mxu0 0.0
  %96 = vmatpush1.msra.mxu0 0.0
  %97 = vmatprep.subr.mxu0 0.0
  %98 = vmatpush1.msra.mxu0 0.0
  %99 = vmatprep.subr.mxu0 0.0
  %100 = vmatpush1.msra.mxu0 0.0
  %101 = vmatprep.subr.mxu0 0.0
  %102 = vmatpush1.msra.mxu0 0.0
  %103 = vmatprep.subr.mxu0 0.0
  %104 = vmatpush1.msra.mxu0 0.0
  %105 = vmatprep.subr.mxu0 0.0
  %106 = vmatpush1.msra.mxu0 0.0
  %107 = vmatprep.subr.mxu0 0.0
  %108 = vmatpush1.msra.mxu0 0.0
  %109 = vmatprep.subr.mxu0 0.0
  %110 = vmatpush1.msra.mxu0 0.0
  %111 = vmatprep.subr.mxu0 0.0
  %112 = vmatpush1.msra.mxu0 0.0
  %113 = vmatprep.subr.mxu0 0.0
  %114 = vmatpush1.msra.mxu0 0.0
  %115 = vmatprep.subr.mxu0 0.0
  %116 = vmatpush1.msra.mxu0 0.0
  %117 = vmatprep.subr.mxu0 0.0
  %118 = vmatpush1.msra.mxu0 0.0
  %119 = vmatprep.subr.mxu0 0.0
  %120 = vmatpush1.msra.mxu0 0.0
  %121 = vmatprep.subr.mxu0 0.0
  %122 = vmatpush1.msra.mxu0 0.0
  %123 = vmatprep.subr.mxu0 0.0
  %124 = vmatpush1.msra.mxu0 0.0
  %125 = vmatprep.mubr.f32.mxu0 0.0
  %126 = vmatmul.mubr.f32.gmra.mrb[0].mxu0 %v34
  %v127 = vpop.f32.mrb[0].mxu0
  %v128 = vadd.f32 %v30, %v127
  %v129 = vpop.f32.mrb[0].mxu0
  %130 = vmatprep.mubr.f32.mxu0 0.0
  %131 = vmatmul.mubr.f32.gmra.mrb[0].mxu0 %v37
  %v132 = vpop.f32.mrb[0].mxu0
  %v133 = vadd.f32 %v30, %v132
  %v134 = vpop.f32.mrb[0].mxu0
  %135 = vmatprep.mubr.f32.mxu0 0.0
  %136 = vmatmul.mubr.f32.gmra.mrb[0].mxu0 %v40
  %v137 = vpop.f32.mrb[0].mxu0
  %v138 = vadd.f32 %v30, %v137
  %v139 = vpop.f32.mrb[0].mxu0
  %140 = vmatprep.mubr.f32.mxu0 0.0
  %141 = vmatmul.mubr.f32.gmra.mrb[0].mxu0 %v43
  %v142 = vpop.f32.mrb[0].mxu0
  %v143 = vadd.f32 %v30, %v142
  %v144 = vpop.f32.mrb[0].mxu0
  %145 = vmatprep.mubr.f32.mxu0 0.0
  %146 = vmatmul.mubr.f32.gmra.mrb[0].mxu0 %v46
  %v147 = vpop.f32.mrb[0].mxu0
  %v148 = vadd.f32 %v30, %v147
  %v149 = vpop.f32.mrb[0].mxu0
  %150 = vmatprep.mubr.f32.mxu0 0.0
  %151 = vmatmul.mubr.f32.gmra.mrb[0].mxu0 %v49
  %v152 = vpop.f32.mrb[0].mxu0
  %v153 = vadd.f32 %v30, %v152
  %v154 = vpop.f32.mrb[0].mxu0
  %155 = vmatprep.mubr.f32.mxu0 0.0
  %156 = vmatmul.mubr.f32.gmra.mrb[0].mxu0 %v52
  %v157 = vpop.f32.mrb[0].mxu0
  %v158 = vadd.f32 %v30, %v157
  %v159 = vpop.f32.mrb[0].mxu0
  %160 = vmatprep.mubr.f32.mxu0 0.0
  %161 = vmatmul.mubr.f32.gmra.mrb[0].mxu0 %v55
  %v162 = vpop.f32.mrb[0].mxu0
  %v163 = vadd.f32 %v30, %v162
  %v164 = vpop.f32.mrb[0].mxu0
  %165 = vdwg.mxu0
  %vm166 = vcmask 130048
  %167 = vst.msk [vmem:[%s3] sm:$0xff] %vm166, %v128
  %168 = vst.msk [vmem:[%s3 + $0x8] sm:$0xff] %vm166, %v133
  %169 = vst.msk [vmem:[%s3 + $0x10] sm:$0xff] %vm166, %v138
  %170 = vst.msk [vmem:[%s3 + $0x18] sm:$0xff] %vm166, %v143
  %171 = vst.msk [vmem:[%s3 + $0x20] sm:$0xff] %vm166, %v148
  %172 = vst.msk [vmem:[%s3 + $0x28] sm:$0xff] %vm166, %v153
  %173 = vst.msk [vmem:[%s3 + $0x30] sm:$0xff] %vm166, %v158
  %174 = vst.msk [vmem:[%s3 + $0x38] sm:$0xff] %vm166, %v163
  // Predicated region
  $region14: #{tpu_custom_call.1} parent=0 // pred_check
    _
  $region15: #{tpu_custom_call.1} parent=0 // pred_check_branch
    %176 = sbr.rel (0) target = $region17
  $region16: #{tpu_custom_call.1} parent=0 // pred_region
    _
  $region17: #{tpu_custom_call.1} parent=0 // pred_fallthru
    _
  // Predicated region
  $region18: #{tpu_custom_call.1} parent=0 // pred_check
    _
  $region19: #{tpu_custom_call.1} parent=0 // pred_check_branch
    %178 = sbr.rel (0) target = $region21
  $region20: #{tpu_custom_call.1} parent=0 // pred_region
    _
  $region21: #{tpu_custom_call.1} parent=0 // pred_fallthru
    _

</llo_original>
